<compile_context>
chip_gen: v7x
topology: tpu7x:2x2x1
jax: 0.10.0
libtpu: 0.0.40
codegen_flags: <defaults>
</compile_context>

<pallas_src>
import numpy as np
import jax
import jax.numpy as jnp
from jax.experimental import pallas as pl
from jax.experimental.pallas import tpu as pltpu

BN_EPS = 1e-5


def _round_up(x, m):
    return (x + m - 1) // m * m


# ---------------------------------------------------------------------------
# Kernel 1: polyphase transposed-conv as a single MXU matmul + bias, with
#           fused per-tile BatchNorm partial statistics (sum, sum of squares).
# ---------------------------------------------------------------------------
def _conv_stats_kernel(a_ref, wt_ref, bias_ref, z_ref, ssum_ref, ssq_ref):
    # (Mp, Kc) @ (Kc, TN) -> (Mp, TN), f32 accumulation on the MXU.
    z = jnp.dot(wt_ref[...], a_ref[...], preferred_element_type=jnp.float32)
    z = z + bias_ref[...]                     # (Mp, 1) broadcast along lanes
    z_ref[...] = z
    # BN partials fused with the conv (no second pass over z).
    ssum_ref[...] = jnp.sum(z, axis=1, keepdims=True)
    ssq_ref[...] = jnp.sum(z * z, axis=1, keepdims=True)


# ---------------------------------------------------------------------------
# Kernel 2: BatchNorm affine (precomputed per-row scale/shift) + ReLU.
# ---------------------------------------------------------------------------
def _bn_relu_kernel(z_ref, scale_ref, shift_ref, y_ref):
    y_ref[...] = jnp.maximum(z_ref[...] * scale_ref[...] + shift_ref[...], 0.0)


# ---------------------------------------------------------------------------
# One decoder block: ConvTranspose1d -> BatchNorm1d (batch stats) -> ReLU.
# ---------------------------------------------------------------------------
def deconv_bn_relu_block(x_ncl, w, b, gamma, beta, stride, output_padding,
                         matmul_dtype=jnp.bfloat16, tn_target=512):
    """x_ncl: (B, Ci, L) channels-first.  w: (Ci, Co, K) torch ConvTranspose1d
    weight, b: (Co,).  Returns (B, Co, L_out)."""
    Ci, Co, K = w.shape
    s = int(stride)
    op = int(output_padding)
    padding = K // 2
    B, _, L = x_ncl.shape
    L_out = (L - 1) * s - 2 * padding + K + op
    Q = -(-L_out // s)                        # output positions per phase

    # ---- static polyphase geometry (pure python ints) ---------------------
    # y[b, co, s*q + r] = bias[co]
    #                   + sum_j x[b, :, q + e(r) - j] @ w[:, co, k0(r) + j*s]
    k0 = [(r + padding) % s for r in range(s)]
    Kp = [(-(-(K - k0[r]) // s)) if k0[r] < K else 0 for r in range(s)]
    e = [(r + padding) // s for r in range(s)]
    active = [r for r in range(s) if Kp[r] > 0]
    hi = max(e[r] for r in active)
    lo = min(e[r] - Kp[r] + 1 for r in active)
    Wwin = hi - lo + 1                        # input window width per output q
    PL = max(0, -lo)
    PR = max(0, (Q - 1) + hi - (L - 1))
    q_off = lo + PL                           # >= 0 by construction

    # ---- wrapper-side layout plumbing (fused by XLA, tiny tensors) --------
    x_pp = jnp.pad(x_ncl.astype(jnp.float32), ((0, 0), (0, 0), (PL, PR)))
    # im2col over Wwin window slots; rows = (slot, ci), cols = (b, q).
    wins = jnp.stack(
        [x_pp[:, :, q_off + m: q_off + m + Q] for m in range(Wwin)], axis=0)
    A = jnp.transpose(wins, (0, 2, 1, 3)).reshape(Wwin * Ci, B * Q)

    Mp = max(8, _round_up(s * Co, 8))         # output rows (sublanes)
    Kc = Wwin * Ci                            # contraction size
    N = B * Q                                 # fused (batch, position) columns
    TN = min(tn_target, _round_up(N, 128))    # lane tile (multiple of 128)
    N_pad = _round_up(N, TN)
    n_tiles = N_pad // TN

    A = jnp.pad(A, ((0, 0), (0, N_pad - N))).astype(matmul_dtype)

    # Phase-combined weight: Wt[r*Co + co, m*Ci + ci] = w[ci, co, k0(r)+j*s]
    # placed at window slot m = e(r) - j - lo.  (No flip: direct definition.)
    Wt = jnp.zeros((Mp, Kc), jnp.float32)
    for r in range(s):
        for j in range(Kp[r]):
            k = k0[r] + j * s
            m = e[r] - j - lo
            Wt = Wt.at[r * Co:(r + 1) * Co, m * Ci:(m + 1) * Ci].set(
                w[:, :, k].T.astype(jnp.float32))
    Wt = Wt.astype(matmul_dtype)
    bias_rows = jnp.zeros((Mp,), jnp.float32).at[:s * Co].set(
        jnp.tile(b.astype(jnp.float32), s))
    bias2d = bias_rows.reshape(Mp, 1)

    # ---- pass 1: conv matmul + fused BN partial stats ---------------------
    # Per-tile working set is tiny (<100 KiB), well under v7x's 64 MiB VMEM.
    z, ssum, ssq = pl.pallas_call(
        _conv_stats_kernel,
        out_shape=(
            jax.ShapeDtypeStruct((Mp, N_pad), jnp.float32),
            jax.ShapeDtypeStruct((n_tiles * Mp, 1), jnp.float32),
            jax.ShapeDtypeStruct((n_tiles * Mp, 1), jnp.float32),
        ),
        grid=(n_tiles,),
        in_specs=[
            pl.BlockSpec((Kc, TN), lambda j: (0, j)),
            pl.BlockSpec((Mp, Kc), lambda j: (0, 0)),
            pl.BlockSpec((Mp, 1), lambda j: (0, 0)),
        ],
        out_specs=(
            pl.BlockSpec((Mp, TN), lambda j: (0, j)),
            pl.BlockSpec((Mp, 1), lambda j: (j, 0)),
            pl.BlockSpec((Mp, 1), lambda j: (j, 0)),
        ),
        compiler_params=pltpu.CompilerParams(
            dimension_semantics=("parallel",)),
    )(A, Wt, bias2d)

    # ---- finalize global BN statistics (tiny glue) -------------------------
    ssum = ssum.reshape(n_tiles, Mp).sum(axis=0)
    ssq = ssq.reshape(n_tiles, Mp).sum(axis=0)
    # Padded (all-zero) columns contributed exactly `bias` per row: remove.
    n_pad_cols = N_pad - N
    if n_pad_cols:
        ssum = ssum - n_pad_cols * bias_rows
        ssq = ssq - n_pad_cols * bias_rows * bias_rows
    # Phases r with s*(Q-1) + r >= L_out at the last q are not real outputs.
    r_valid = L_out - s * (Q - 1)
    if r_valid < s:
        ztail = z[:, Q - 1:N:Q]               # (Mp, B) last-q columns
        mask = np.zeros((Mp,), bool)
        for r in range(r_valid, s):
            mask[r * Co:(r + 1) * Co] = True
        mask = jnp.asarray(mask)
        ssum = ssum - jnp.where(mask, jnp.sum(ztail, axis=1), 0.0)
        ssq = ssq - jnp.where(mask, jnp.sum(ztail * ztail, axis=1), 0.0)

    cnt = B * L_out                           # per-channel element count
    sum_c = ssum[:s * Co].reshape(s, Co).sum(axis=0)
    sq_c = ssq[:s * Co].reshape(s, Co).sum(axis=0)
    mean = sum_c / cnt
    var = sq_c / cnt - mean * mean            # biased var (training-mode BN)
    inv = jax.lax.rsqrt(var + BN_EPS)
    scale_c = gamma.astype(jnp.float32) * inv
    shift_c = beta.astype(jnp.float32) - mean * scale_c
    scale_rows = jnp.zeros((Mp,), jnp.float32).at[:s * Co].set(
        jnp.tile(scale_c, s)).reshape(Mp, 1)
    shift_rows = jnp.zeros((Mp,), jnp.float32).at[:s * Co].set(
        jnp.tile(shift_c, s)).reshape(Mp, 1)

    # ---- pass 2: normalize + ReLU (lane-dense elementwise) ------------------
    y = pl.pallas_call(
        _bn_relu_kernel,
        out_shape=jax.ShapeDtypeStruct((Mp, N_pad), jnp.float32),
        grid=(n_tiles,),
        in_specs=[
            pl.BlockSpec((Mp, TN), lambda j: (0, j)),
            pl.BlockSpec((Mp, 1), lambda j: (0, 0)),
            pl.BlockSpec((Mp, 1), lambda j: (0, 0)),
        ],
        out_specs=pl.BlockSpec((Mp, TN), lambda j: (0, j)),
        compiler_params=pltpu.CompilerParams(
            dimension_semantics=("parallel",)),
    )(z, scale_rows, shift_rows)

    # ---- unpack phases back to channels-first (B, Co, L_out) ---------------
    y = y[:s * Co, :N].reshape(s, Co, B, Q)
    y = jnp.transpose(y, (2, 1, 3, 0)).reshape(B, Co, Q * s)[:, :, :L_out]
    return y


def decoder_forward(x, encoder_outputs, layers, matmul_dtype=jnp.bfloat16):
    latent = x
    n = len(encoder_outputs) if encoder_outputs is not None else 0
    for i, p in enumerate(layers):
        if i < n:
            latent = latent + encoder_outputs[n - i - 1]   # skip connection
        latent = deconv_bn_relu_block(
            latent, p['w'], p['b'], p['gamma'], p['beta'],
            p['stride'], p['output_padding'], matmul_dtype=matmul_dtype)
    return latent


# ---------------------------------------------------------------------------
# Pure numpy reference (direct ConvTranspose1d definition) for validation.
# ---------------------------------------------------------------------------
def _ref_convtranspose1d(x, w, b, stride, padding, output_padding):
    B, Ci, L = x.shape
    _, Co, K = w.shape
    L_out = (L - 1) * stride - 2 * padding + K + output_padding
    y = np.zeros((B, Co, L_out), np.float64)
    for li in range(L):
        for k in range(K):
            t = li * stride + k - padding
            if 0 <= t < L_out:
                y[:, :, t] += x[:, :, li] @ w[:, :, k]
    return y + b[None, :, None]


def ref_forward(x, encoder_outputs, layers):
    latent = x
    n = len(encoder_outputs)
    for i, p in enumerate(layers):
        if i < n:
            latent = latent + encoder_outputs[n - i - 1]
        w = np.asarray(p['w'], np.float64)
        b = np.asarray(p['b'], np.float64)
        g = np.asarray(p['gamma'], np.float64)
        beta = np.asarray(p['beta'], np.float64)
        K = w.shape[2]
        y = _ref_convtranspose1d(latent, w, b, p['stride'], K // 2,
                                 p['output_padding'])
        mean = y.mean(axis=(0, 2), keepdims=True)
        var = y.var(axis=(0, 2), keepdims=True)        # biased, like torch BN
        y = g[None, :, None] * (y - mean) / np.sqrt(var + BN_EPS) \
            + beta[None, :, None]
        latent = np.maximum(y, 0.0)
    return latent


if __name__ == "__main__":
    # Config mirroring the encoder this decoder inverts.
    conv_channels = [8, 16]
    kernel_sizes = [3, 5]
    pool_sizes = [2, 2]
    out_channels = 4
    final_conv_channels = conv_channels[-1]
    B, L0 = 2, 8

    key = jax.random.PRNGKey(0)

    # Build decoder parameters exactly as __init__ does.
    rev_c = conv_channels[::-1]
    rev_k = kernel_sizes[::-1]
    rev_p = pool_sizes[::-1]
    layers = []
    cur = final_conv_channels
    for i in range(len(rev_c)):
        out_c = rev_c[i] if i < len(rev_c) - 1 else out_channels
        k_sz = rev_k[i]
        st = rev_p[i]
        opd = 1 if st > 1 else 0
        key, kw, kb, kg, kbt = jax.random.split(key, 5)
        layers.append(dict(
            w=0.1 * jax.random.normal(kw, (cur, out_c, k_sz), jnp.float32),
            b=0.1 * jax.random.normal(kb, (out_c,), jnp.float32),
            gamma=1.0 + 0.1 * jax.random.normal(kg, (out_c,), jnp.float32),
            beta=0.1 * jax.random.normal(kbt, (out_c,), jnp.float32),
            stride=st, output_padding=opd))
        cur = out_c
    # TODO(synk): the module also defines self.linear(out_channels, out_channels)
    # but never applies it in forward(); intentionally omitted.

    key, kx, ke0, ke1 = jax.random.split(key, 4)
    x = jax.random.normal(kx, (B, final_conv_channels, L0), jnp.float32)
    # Encoder feature maps for skip connections (shapes match the decoder path).
    encoder_outputs = [
        jax.random.normal(ke0, (B, 16, 16), jnp.float32),   # added before layer 1
        jax.random.normal(ke1, (B, final_conv_channels, L0), jnp.float32),  # layer 0
    ]

    ref = ref_forward(np.asarray(x, np.float64),
                      [np.asarray(eo, np.float64) for eo in encoder_outputs],
                      layers)

    # f32 matmul operands: tight numerical check.
    run_f32 = jax.jit(lambda xx, sk: decoder_forward(
        xx, sk, layers, matmul_dtype=jnp.float32))
    out32 = jax.block_until_ready(run_f32(x, encoder_outputs))
    assert out32.shape == (B, out_channels, 32), out32.shape
    np.testing.assert_allclose(np.asarray(out32), ref, rtol=2e-3, atol=2e-3)

    # bf16 matmul operands (halves activation/weight traffic on v6e/v7x,
    # f32 accumulation + f32 BN): looser check.
    run_bf16 = jax.jit(lambda xx, sk: decoder_forward(
        xx, sk, layers, matmul_dtype=jnp.bfloat16))
    out16 = jax.block_until_ready(run_bf16(x, encoder_outputs))
    assert out16.shape == (B, out_channels, 32), out16.shape
    np.testing.assert_allclose(np.asarray(out16), ref, rtol=8e-2, atol=8e-2)

    print("KERNEL_OK")
</pallas_src>

<mosaic_0001>
module attributes {stable_mosaic.version = 11 : i64} {
  func.func @_conv_stats_kernel(%arg0: i32, %arg1: memref<48x128xf32, #tpu.memory_space<vmem>>, %arg2: memref<32x48xf32, #tpu.memory_space<vmem>>, %arg3: memref<32x1xf32, #tpu.memory_space<vmem>>, %arg4: memref<32x128xf32, #tpu.memory_space<vmem>>, %arg5: memref<32x1xf32, #tpu.memory_space<vmem>>, %arg6: memref<32x1xf32, #tpu.memory_space<vmem>>) attributes {dimension_semantics = [#tpu.dimension_semantics<parallel>], iteration_bounds = array<i64: 1>, scalar_prefetch = 0 : i64, scratch_operands = 0 : i64, tpu.core_type = #tpu.core_type<tc>, window_params = [{transform_indices = @transform_0, window_bounds = array<i64: 48, 128>}, {pipeline_mode = #tpu.pipeline_mode<synchronous>, transform_indices = @transform_1, window_bounds = array<i64: 32, 48>}, {pipeline_mode = #tpu.pipeline_mode<synchronous>, transform_indices = @transform_2, window_bounds = array<i64: 32, 1>}, {transform_indices = @transform_3, window_bounds = array<i64: 32, 128>}, {transform_indices = @transform_4, window_bounds = array<i64: 32, 1>}, {transform_indices = @transform_5, window_bounds = array<i64: 32, 1>}]} {
    %c0 = arith.constant 0 : index
    %c0_0 = arith.constant 0 : index
    %0 = vector.load %arg2[%c0, %c0_0] : memref<32x48xf32, #tpu.memory_space<vmem>>, vector<32x48xf32>
    %c0_1 = arith.constant 0 : index
    %c0_2 = arith.constant 0 : index
    %1 = vector.load %arg1[%c0_1, %c0_2] : memref<48x128xf32, #tpu.memory_space<vmem>>, vector<48x128xf32>
    %cst = arith.constant dense<0.000000e+00> : vector<32x128xf32>
    %2 = tpu.matmul %0, %1, %cst {dimension_numbers = #tpu.dot_dimension_numbers<[1], [0], [0], [1], [0, 0, 1, 1], [], []>} : vector<32x48xf32>, vector<48x128xf32>, vector<32x128xf32> -> vector<32x128xf32>
    %c0_3 = arith.constant 0 : index
    %c0_4 = arith.constant 0 : index
    %3 = vector.load %arg3[%c0_3, %c0_4] : memref<32x1xf32, #tpu.memory_space<vmem>>, vector<32x1xf32>
    %4 = vector.broadcast %3 : vector<32x1xf32> to vector<32x128xf32>
    %5 = arith.addf %2, %4 : vector<32x128xf32>
    %c0_5 = arith.constant 0 : index
    %c0_6 = arith.constant 0 : index
    %6 = vector.load %arg4[%c0_5, %c0_6] : memref<32x128xf32, #tpu.memory_space<vmem>>, vector<32x128xf32>
    tpu.vector_store %arg4[%c0_5, %c0_6], %5 {strides = array<i32>} : memref<32x128xf32, #tpu.memory_space<vmem>>, vector<32x128xf32>,
    %cst_7 = arith.constant dense<0.000000e+00> : vector<32xf32>
    %7 = vector.multi_reduction <add>, %5, %cst_7 [1] : vector<32x128xf32> to vector<32xf32>
    %8 = vector.shape_cast %7 : vector<32xf32> to vector<32x1xf32>
    %c0_8 = arith.constant 0 : index
    %c0_9 = arith.constant 0 : index
    %9 = vector.load %arg5[%c0_8, %c0_9] : memref<32x1xf32, #tpu.memory_space<vmem>>, vector<32x1xf32>
    tpu.vector_store %arg5[%c0_8, %c0_9], %8 {strides = array<i32>} : memref<32x1xf32, #tpu.memory_space<vmem>>, vector<32x1xf32>,
    %10 = arith.mulf %5, %5 : vector<32x128xf32>
    %cst_10 = arith.constant dense<0.000000e+00> : vector<32xf32>
    %11 = vector.multi_reduction <add>, %10, %cst_10 [1] : vector<32x128xf32> to vector<32xf32>
    %12 = vector.shape_cast %11 : vector<32xf32> to vector<32x1xf32>
    %c0_11 = arith.constant 0 : index
    %c0_12 = arith.constant 0 : index
    %13 = vector.load %arg6[%c0_11, %c0_12] : memref<32x1xf32, #tpu.memory_space<vmem>>, vector<32x1xf32>
    tpu.vector_store %arg6[%c0_11, %c0_12], %12 {strides = array<i32>} : memref<32x1xf32, #tpu.memory_space<vmem>>, vector<32x1xf32>,
    return
  }
  func.func @transform_0(%arg0: i32) -> (i32, i32) {
    %c0_i32 = arith.constant 0 : i32
    %c0_i32_0 = arith.constant 0 : i32
    return %c0_i32, %arg0 : i32, i32
  }
  func.func @transform_1(%arg0: i32) -> (i32, i32) {
    %c0_i32 = arith.constant 0 : i32
    %c0_i32_0 = arith.constant 0 : i32
    %c0_i32_1 = arith.constant 0 : i32
    return %c0_i32, %c0_i32_0 : i32, i32
  }
  func.func @transform_2(%arg0: i32) -> (i32, i32) {
    %c0_i32 = arith.constant 0 : i32
    %c0_i32_0 = arith.constant 0 : i32
    %c0_i32_1 = arith.constant 0 : i32
    return %c0_i32, %c0_i32_0 : i32, i32
  }
  func.func @transform_3(%arg0: i32) -> (i32, i32) {
    %c0_i32 = arith.constant 0 : i32
    %c0_i32_0 = arith.constant 0 : i32
    return %c0_i32, %arg0 : i32, i32
  }
  func.func @transform_4(%arg0: i32) -> (i32, i32) {
    %c0_i32 = arith.constant 0 : i32
    %c0_i32_0 = arith.constant 0 : i32
    return %arg0, %c0_i32 : i32, i32
  }
  func.func @transform_5(%arg0: i32) -> (i32, i32) {
    %c0_i32 = arith.constant 0 : i32
    %c0_i32_0 = arith.constant 0 : i32
    return %arg0, %c0_i32 : i32, i32
  }
}

module attributes {stable_mosaic.version = 11 : i64} {
  func.func @_bn_relu_kernel(%arg0: i32, %arg1: memref<32x128xf32, #tpu.memory_space<vmem>>, %arg2: memref<32x1xf32, #tpu.memory_space<vmem>>, %arg3: memref<32x1xf32, #tpu.memory_space<vmem>>, %arg4: memref<32x128xf32, #tpu.memory_space<vmem>>) attributes {dimension_semantics = [#tpu.dimension_semantics<parallel>], iteration_bounds = array<i64: 1>, scalar_prefetch = 0 : i64, scratch_operands = 0 : i64, tpu.core_type = #tpu.core_type<tc>, window_params = [{transform_indices = @transform_0, window_bounds = array<i64: 32, 128>}, {pipeline_mode = #tpu.pipeline_mode<synchronous>, transform_indices = @transform_1, window_bounds = array<i64: 32, 1>}, {pipeline_mode = #tpu.pipeline_mode<synchronous>, transform_indices = @transform_2, window_bounds = array<i64: 32, 1>}, {transform_indices = @transform_3, window_bounds = array<i64: 32, 128>}]} {
    %c0 = arith.constant 0 : index
    %c0_0 = arith.constant 0 : index
    %0 = vector.load %arg1[%c0, %c0_0] : memref<32x128xf32, #tpu.memory_space<vmem>>, vector<32x128xf32>
    %c0_1 = arith.constant 0 : index
    %c0_2 = arith.constant 0 : index
    %1 = vector.load %arg2[%c0_1, %c0_2] : memref<32x1xf32, #tpu.memory_space<vmem>>, vector<32x1xf32>
    %2 = vector.broadcast %1 : vector<32x1xf32> to vector<32x128xf32>
    %3 = arith.mulf %0, %2 : vector<32x128xf32>
    %c0_3 = arith.constant 0 : index
    %c0_4 = arith.constant 0 : index
    %4 = vector.load %arg3[%c0_3, %c0_4] : memref<32x1xf32, #tpu.memory_space<vmem>>, vector<32x1xf32>
    %5 = vector.broadcast %4 : vector<32x1xf32> to vector<32x128xf32>
    %6 = arith.addf %3, %5 : vector<32x128xf32>
    %cst = arith.constant 0.000000e+00 : f32
    %7 = vector.broadcast %cst : f32 to vector<32x128xf32>
    %8 = arith.maximumf %6, %7 : vector<32x128xf32>
    %c0_5 = arith.constant 0 : index
    %c0_6 = arith.constant 0 : index
    %9 = vector.load %arg4[%c0_5, %c0_6] : memref<32x128xf32, #tpu.memory_space<vmem>>, vector<32x128xf32>
    tpu.vector_store %arg4[%c0_5, %c0_6], %8 {strides = array<i32>} : memref<32x128xf32, #tpu.memory_space<vmem>>, vector<32x128xf32>,
    return
  }
  func.func @transform_0(%arg0: i32) -> (i32, i32) {
    %c0_i32 = arith.constant 0 : i32
    %c0_i32_0 = arith.constant 0 : i32
    return %c0_i32, %arg0 : i32, i32
  }
  func.func @transform_1(%arg0: i32) -> (i32, i32) {
    %c0_i32 = arith.constant 0 : i32
    %c0_i32_0 = arith.constant 0 : i32
    %c0_i32_1 = arith.constant 0 : i32
    return %c0_i32, %c0_i32_0 : i32, i32
  }
  func.func @transform_2(%arg0: i32) -> (i32, i32) {
    %c0_i32 = arith.constant 0 : i32
    %c0_i32_0 = arith.constant 0 : i32
    %c0_i32_1 = arith.constant 0 : i32
    return %c0_i32, %c0_i32_0 : i32, i32
  }
  func.func @transform_3(%arg0: i32) -> (i32, i32) {
    %c0_i32 = arith.constant 0 : i32
    %c0_i32_0 = arith.constant 0 : i32
    return %c0_i32, %arg0 : i32, i32
  }
}

module attributes {stable_mosaic.version = 11 : i64} {
  func.func @_conv_stats_kernel(%arg0: i32, %arg1: memref<32x128xf32, #tpu.memory_space<vmem>>, %arg2: memref<8x32xf32, #tpu.memory_space<vmem>>, %arg3: memref<8x1xf32, #tpu.memory_space<vmem>>, %arg4: memref<8x128xf32, #tpu.memory_space<vmem>>, %arg5: memref<8x1xf32, #tpu.memory_space<vmem>>, %arg6: memref<8x1xf32, #tpu.memory_space<vmem>>) attributes {dimension_semantics = [#tpu.dimension_semantics<parallel>], iteration_bounds = array<i64: 1>, scalar_prefetch = 0 : i64, scratch_operands = 0 : i64, tpu.core_type = #tpu.core_type<tc>, window_params = [{transform_indices = @transform_0, window_bounds = array<i64: 32, 128>}, {pipeline_mode = #tpu.pipeline_mode<synchronous>, transform_indices = @transform_1, window_bounds = array<i64: 8, 32>}, {pipeline_mode = #tpu.pipeline_mode<synchronous>, transform_indices = @transform_2, window_bounds = array<i64: 8, 1>}, {transform_indices = @transform_3, window_bounds = array<i64: 8, 128>}, {transform_indices = @transform_4, window_bounds = array<i64: 8, 1>}, {transform_indices = @transform_5, window_bounds = array<i64: 8, 1>}]} {
    %c0 = arith.constant 0 : index
    %c0_0 = arith.constant 0 : index
    %0 = vector.load %arg2[%c0, %c0_0] : memref<8x32xf32, #tpu.memory_space<vmem>>, vector<8x32xf32>
    %c0_1 = arith.constant 0 : index
    %c0_2 = arith.constant 0 : index
    %1 = vector.load %arg1[%c0_1, %c0_2] : memref<32x128xf32, #tpu.memory_space<vmem>>, vector<32x128xf32>
    %cst = arith.constant dense<0.000000e+00> : vector<8x128xf32>
    %2 = tpu.matmul %0, %1, %cst {dimension_numbers = #tpu.dot_dimension_numbers<[1], [0], [0], [1], [0, 0, 1, 1], [], []>} : vector<8x32xf32>, vector<32x128xf32>, vector<8x128xf32> -> vector<8x128xf32>
    %c0_3 = arith.constant 0 : index
    %c0_4 = arith.constant 0 : index
    %3 = vector.load %arg3[%c0_3, %c0_4] : memref<8x1xf32, #tpu.memory_space<vmem>>, vector<8x1xf32>
    %4 = vector.broadcast %3 : vector<8x1xf32> to vector<8x128xf32>
    %5 = arith.addf %2, %4 : vector<8x128xf32>
    %c0_5 = arith.constant 0 : index
    %c0_6 = arith.constant 0 : index
    %6 = vector.load %arg4[%c0_5, %c0_6] : memref<8x128xf32, #tpu.memory_space<vmem>>, vector<8x128xf32>
    tpu.vector_store %arg4[%c0_5, %c0_6], %5 {strides = array<i32>} : memref<8x128xf32, #tpu.memory_space<vmem>>, vector<8x128xf32>,
    %cst_7 = arith.constant dense<0.000000e+00> : vector<8xf32>
    %7 = vector.multi_reduction <add>, %5, %cst_7 [1] : vector<8x128xf32> to vector<8xf32>
    %8 = vector.shape_cast %7 : vector<8xf32> to vector<8x1xf32>
    %c0_8 = arith.constant 0 : index
    %c0_9 = arith.constant 0 : index
    %9 = vector.load %arg5[%c0_8, %c0_9] : memref<8x1xf32, #tpu.memory_space<vmem>>, vector<8x1xf32>
    tpu.vector_store %arg5[%c0_8, %c0_9], %8 {strides = array<i32>} : memref<8x1xf32, #tpu.memory_space<vmem>>, vector<8x1xf32>,
    %10 = arith.mulf %5, %5 : vector<8x128xf32>
    %cst_10 = arith.constant dense<0.000000e+00> : vector<8xf32>
    %11 = vector.multi_reduction <add>, %10, %cst_10 [1] : vector<8x128xf32> to vector<8xf32>
    %12 = vector.shape_cast %11 : vector<8xf32> to vector<8x1xf32>
    %c0_11 = arith.constant 0 : index
    %c0_12 = arith.constant 0 : index
    %13 = vector.load %arg6[%c0_11, %c0_12] : memref<8x1xf32, #tpu.memory_space<vmem>>, vector<8x1xf32>
    tpu.vector_store %arg6[%c0_11, %c0_12], %12 {strides = array<i32>} : memref<8x1xf32, #tpu.memory_space<vmem>>, vector<8x1xf32>,
    return
  }
  func.func @transform_0(%arg0: i32) -> (i32, i32) {
    %c0_i32 = arith.constant 0 : i32
    %c0_i32_0 = arith.constant 0 : i32
    return %c0_i32, %arg0 : i32, i32
  }
  func.func @transform_1(%arg0: i32) -> (i32, i32) {
    %c0_i32 = arith.constant 0 : i32
    %c0_i32_0 = arith.constant 0 : i32
    %c0_i32_1 = arith.constant 0 : i32
    return %c0_i32, %c0_i32_0 : i32, i32
  }
  func.func @transform_2(%arg0: i32) -> (i32, i32) {
    %c0_i32 = arith.constant 0 : i32
    %c0_i32_0 = arith.constant 0 : i32
    %c0_i32_1 = arith.constant 0 : i32
    return %c0_i32, %c0_i32_0 : i32, i32
  }
  func.func @transform_3(%arg0: i32) -> (i32, i32) {
    %c0_i32 = arith.constant 0 : i32
    %c0_i32_0 = arith.constant 0 : i32
    return %c0_i32, %arg0 : i32, i32
  }
  func.func @transform_4(%arg0: i32) -> (i32, i32) {
    %c0_i32 = arith.constant 0 : i32
    %c0_i32_0 = arith.constant 0 : i32
    return %arg0, %c0_i32 : i32, i32
  }
  func.func @transform_5(%arg0: i32) -> (i32, i32) {
    %c0_i32 = arith.constant 0 : i32
    %c0_i32_0 = arith.constant 0 : i32
    return %arg0, %c0_i32 : i32, i32
  }
}

module attributes {stable_mosaic.version = 11 : i64} {
  func.func @_bn_relu_kernel(%arg0: i32, %arg1: memref<8x128xf32, #tpu.memory_space<vmem>>, %arg2: memref<8x1xf32, #tpu.memory_space<vmem>>, %arg3: memref<8x1xf32, #tpu.memory_space<vmem>>, %arg4: memref<8x128xf32, #tpu.memory_space<vmem>>) attributes {dimension_semantics = [#tpu.dimension_semantics<parallel>], iteration_bounds = array<i64: 1>, scalar_prefetch = 0 : i64, scratch_operands = 0 : i64, tpu.core_type = #tpu.core_type<tc>, window_params = [{transform_indices = @transform_0, window_bounds = array<i64: 8, 128>}, {pipeline_mode = #tpu.pipeline_mode<synchronous>, transform_indices = @transform_1, window_bounds = array<i64: 8, 1>}, {pipeline_mode = #tpu.pipeline_mode<synchronous>, transform_indices = @transform_2, window_bounds = array<i64: 8, 1>}, {transform_indices = @transform_3, window_bounds = array<i64: 8, 128>}]} {
    %c0 = arith.constant 0 : index
    %c0_0 = arith.constant 0 : index
    %0 = vector.load %arg1[%c0, %c0_0] : memref<8x128xf32, #tpu.memory_space<vmem>>, vector<8x128xf32>
    %c0_1 = arith.constant 0 : index
    %c0_2 = arith.constant 0 : index
    %1 = vector.load %arg2[%c0_1, %c0_2] : memref<8x1xf32, #tpu.memory_space<vmem>>, vector<8x1xf32>
    %2 = vector.broadcast %1 : vector<8x1xf32> to vector<8x128xf32>
    %3 = arith.mulf %0, %2 : vector<8x128xf32>
    %c0_3 = arith.constant 0 : index
    %c0_4 = arith.constant 0 : index
    %4 = vector.load %arg3[%c0_3, %c0_4] : memref<8x1xf32, #tpu.memory_space<vmem>>, vector<8x1xf32>
    %5 = vector.broadcast %4 : vector<8x1xf32> to vector<8x128xf32>
    %6 = arith.addf %3, %5 : vector<8x128xf32>
    %cst = arith.constant 0.000000e+00 : f32
    %7 = vector.broadcast %cst : f32 to vector<8x128xf32>
    %8 = arith.maximumf %6, %7 : vector<8x128xf32>
    %c0_5 = arith.constant 0 : index
    %c0_6 = arith.constant 0 : index
    %9 = vector.load %arg4[%c0_5, %c0_6] : memref<8x128xf32, #tpu.memory_space<vmem>>, vector<8x128xf32>
    tpu.vector_store %arg4[%c0_5, %c0_6], %8 {strides = array<i32>} : memref<8x128xf32, #tpu.memory_space<vmem>>, vector<8x128xf32>,
    return
  }
  func.func @transform_0(%arg0: i32) -> (i32, i32) {
    %c0_i32 = arith.constant 0 : i32
    %c0_i32_0 = arith.constant 0 : i32
    return %c0_i32, %arg0 : i32, i32
  }
  func.func @transform_1(%arg0: i32) -> (i32, i32) {
    %c0_i32 = arith.constant 0 : i32
    %c0_i32_0 = arith.constant 0 : i32
    %c0_i32_1 = arith.constant 0 : i32
    return %c0_i32, %c0_i32_0 : i32, i32
  }
  func.func @transform_2(%arg0: i32) -> (i32, i32) {
    %c0_i32 = arith.constant 0 : i32
    %c0_i32_0 = arith.constant 0 : i32
    %c0_i32_1 = arith.constant 0 : i32
    return %c0_i32, %c0_i32_0 : i32, i32
  }
  func.func @transform_3(%arg0: i32) -> (i32, i32) {
    %c0_i32 = arith.constant 0 : i32
    %c0_i32_0 = arith.constant 0 : i32
    return %c0_i32, %arg0 : i32, i32
  }
}

</mosaic_0001>

<llo_original>
// kernel: tile.30
$region0: #{tile.30}
  #allocation0 [shape = 's32[1]{0}', space=sflag, size = 0x4, scoped, tag = 'scoped memory for tile.30']
  %s0 = inlined_call_operand.vmem [shape: f32[16], index: 0, kind: input, shape index: {}]
  %s1 = inlined_call_operand.vmem [shape: f32[2,16], index: 1, kind: output, shape index: {}]
  // Predicated region
  $region2: #{tile.30} parent=0 // pred_check
    _
  $region3: #{tile.30} parent=0 // pred_check_branch
    %3 = sbr.rel (0) target = $region5
  $region4: #{tile.30} parent=0 // pred_region
    _
  $region5: #{tile.30} parent=0 // pred_fallthru
    _
  %v4 = vld [vmem:[%s0] ss:$0 sm:$0xff]
  %5 = vst [vmem:[%s1] sm:$0x3] %v4

// kernel: tile.44
$region0: #{tile.44}
  #allocation0 [shape = 's32[1]{0}', space=sflag, size = 0x4, scoped, tag = 'scoped memory for tile.44']
  %s0 = inlined_call_operand.vmem [shape: f32[4], index: 0, kind: input, shape index: {}]
  %s1 = inlined_call_operand.vmem [shape: f32[2,4], index: 1, kind: output, shape index: {}]
  // Predicated region
  $region2: #{tile.44} parent=0 // pred_check
    _
  $region3: #{tile.44} parent=0 // pred_check_branch
    %3 = sbr.rel (0) target = $region5
  $region4: #{tile.44} parent=0 // pred_region
    _
  $region5: #{tile.44} parent=0 // pred_fallthru
    _
  %v4 = vld [vmem:[%s0] ss:$0 sm:$0xff]
  %5 = vst [vmem:[%s1] sm:$0x3] %v4

// kernel: _lambda_.5
$region0: #{_lambda_.5}
  #allocation0 [shape = 'u32[]', space=smem, size = 0x4, offset = 0x4, fixed_abs, tag = 'smem constant byte address 0x4 - core index']
  #allocation1 [shape = 'u32[144,128]{1,0:T(1,128)}', space=vmem, size = 0x12000, scoped, tag = 'internal scratch']
  %s0 = inlined_call_operand.vmem [shape: f32[32,128], index: 0, kind: input, shape index: {}]
  %s1 = inlined_call_operand.vmem [shape: f32[32,1], index: 1, kind: input, shape index: {}]
  %s2 = inlined_call_operand.vmem [shape: f32[32,1], index: 2, kind: input, shape index: {}]
  %s3 = inlined_call_operand.vmem [shape: f32[32,128], index: 3, kind: output, shape index: {}]
  %s4 = sld [smem:[#allocation0]]
  $region22: #{_lambda_.5} parent=0
    _
  %s6 = ssub.s32 1, %s4
  %s7 = scalar_select 0, %s6, %s4
  // Predicated region
  $region2: #{_lambda_.5} parent=0 // pred_check
    _
  $region3: #{_lambda_.5} parent=0 // pred_check_branch
    %9 = sbr.rel (0) target = $region5
  $region4: #{_lambda_.5} parent=0 // pred_region
    _
  $region5: #{_lambda_.5} parent=0 // pred_fallthru
    _
  // Predicated region
  $region6: #{_lambda_.5} parent=0 // pred_check
    _
  $region7: #{_lambda_.5} parent=0 // pred_check_branch
    %11 = sbr.rel (0) target = $region9
  $region8: #{_lambda_.5} parent=0 // pred_region
    _
  $region9: #{_lambda_.5} parent=0 // pred_fallthru
    _
  // Predicated region
  $region10: #{_lambda_.5} parent=0 // pred_check
    _
  $region11: #{_lambda_.5} parent=0 // pred_check_branch
    %13 = sbr.rel (0) target = $region13
  $region12: #{_lambda_.5} parent=0 // pred_region
    _
  $region13: #{_lambda_.5} parent=0 // pred_fallthru
    _
  %v14 = vld [vmem:[%s0] sm:$0xff]
  %v15 = vld [vmem:[%s0 + $0x8] sm:$0xff]
  %v16 = vld [vmem:[%s0 + $0x10] sm:$0xff]
  %v17 = vld [vmem:[%s0 + $0x18] sm:$0xff]
  %v18 = vld [vmem:[%s1] sm:$0xff]
  %v19 = vld [vmem:[%s1 + $0x8] sm:$0xff]
  %v20 = vld [vmem:[%s1 + $0x10] sm:$0xff]
  %v21 = vld [vmem:[%s1 + $0x18] sm:$0xff]
  %23 = vset.pattern.permute.xlu0 0
  %24 = vperm.xlu0 %23, %v18
  %v25 = vpop.permute.xlu0 %24
  %28 = vset.pattern.permute.xlu0 0
  %29 = vperm.xlu0 %28, %v19
  %v30 = vpop.permute.xlu0 %29
  %33 = vset.pattern.permute.xlu0 0
  %34 = vperm.xlu0 %33, %v20
  %v35 = vpop.permute.xlu0 %34
  %38 = vset.pattern.permute.xlu0 0
  %39 = vperm.xlu0 %38, %v21
  %v40 = vpop.permute.xlu0 %39
  %v42 = vmul.f32 %v14, %v25
  %v43 = vmul.f32 %v15, %v30
  %v44 = vmul.f32 %v16, %v35
  %v45 = vmul.f32 %v17, %v40
  %v46 = vld [vmem:[%s2] sm:$0xff]
  %v47 = vld [vmem:[%s2 + $0x8] sm:$0xff]
  %v48 = vld [vmem:[%s2 + $0x10] sm:$0xff]
  %v49 = vld [vmem:[%s2 + $0x18] sm:$0xff]
  %51 = vset.pattern.permute.xlu0 0
  %52 = vperm.xlu0 %51, %v46
  %v53 = vpop.permute.xlu0 %52
  %56 = vset.pattern.permute.xlu0 0
  %57 = vperm.xlu0 %56, %v47
  %v58 = vpop.permute.xlu0 %57
  %61 = vset.pattern.permute.xlu0 0
  %62 = vperm.xlu0 %61, %v48
  %v63 = vpop.permute.xlu0 %62
  %66 = vset.pattern.permute.xlu0 0
  %67 = vperm.xlu0 %66, %v49
  %v68 = vpop.permute.xlu0 %67
  %v70 = vadd.f32 %v42, %v53
  %v71 = vadd.f32 %v43, %v58
  %v72 = vadd.f32 %v44, %v63
  %v73 = vadd.f32 %v45, %v68
  %v74 = vmax.f32 %v70, 0.0
  %v75 = vmax.f32 %v71, 0.0
  %v76 = vmax.f32 %v72, 0.0
  %v77 = vmax.f32 %v73, 0.0
  %78 = vst [vmem:[%s3] sm:$0xff] %v74
  %79 = vst [vmem:[%s3 + $0x8] sm:$0xff] %v75
  %80 = vst [vmem:[%s3 + $0x10] sm:$0xff] %v76
  %81 = vst [vmem:[%s3 + $0x18] sm:$0xff] %v77
  // Predicated region
  $region14: #{_lambda_.5} parent=0 // pred_check
    _
  $region15: #{_lambda_.5} parent=0 // pred_check_branch
    %83 = sbr.rel (0) target = $region17
  $region16: #{_lambda_.5} parent=0 // pred_region
    _
  $region17: #{_lambda_.5} parent=0 // pred_fallthru
    _
  // Predicated region
  $region18: #{_lambda_.5} parent=0 // pred_check
    _
  $region19: #{_lambda_.5} parent=0 // pred_check_branch
    %85 = sbr.rel (0) target = $region21
  $region20: #{_lambda_.5} parent=0 // pred_region
    _
  $region21: #{_lambda_.5} parent=0 // pred_fallthru
    _

// kernel: _lambda_.4
$region0: #{_lambda_.4}
  #allocation0 [shape = 'u32[]', space=smem, size = 0x4, offset = 0x4, fixed_abs, tag = 'smem constant byte address 0x4 - core index']
  #allocation1 [shape = 'u32[144,128]{1,0:T(1,128)}', space=vmem, size = 0x12000, scoped, tag = 'internal scratch']
  %s0 = inlined_call_operand.vmem [shape: f32[48,128], index: 0, kind: input, shape index: {}]
  %s1 = inlined_call_operand.vmem [shape: f32[32,48], index: 1, kind: input, shape index: {}]
  %s2 = inlined_call_operand.vmem [shape: f32[32,1], index: 2, kind: input, shape index: {}]
  %s3 = inlined_call_operand.vmem [shape: f32[32,128], index: 3, kind: output, shape index: {0}]
  %s4 = inlined_call_operand.vmem [shape: f32[32,1], index: 4, kind: output, shape index: {1}]
  %s5 = inlined_call_operand.vmem [shape: f32[32,1], index: 5, kind: output, shape index: {2}]
  %6 = xla_tuple %s3, %s4, %s5
  %s7 = sld [smem:[#allocation0]]
  $region38: #{_lambda_.4} parent=0
    _
  %s9 = ssub.s32 1, %s7
  %s10 = scalar_select 0, %s9, %s7
  // Predicated region
  $region2: #{_lambda_.4} parent=0 // pred_check
    _
  $region3: #{_lambda_.4} parent=0 // pred_check_branch
    %12 = sbr.rel (0) target = $region5
  $region4: #{_lambda_.4} parent=0 // pred_region
    _
  $region5: #{_lambda_.4} parent=0 // pred_fallthru
    _
  // Predicated region
  $region6: #{_lambda_.4} parent=0 // pred_check
    _
  $region7: #{_lambda_.4} parent=0 // pred_check_branch
    %14 = sbr.rel (0) target = $region9
  $region8: #{_lambda_.4} parent=0 // pred_region
    _
  $region9: #{_lambda_.4} parent=0 // pred_fallthru
    _
  // Predicated region
  $region10: #{_lambda_.4} parent=0 // pred_check
    _
  $region11: #{_lambda_.4} parent=0 // pred_check_branch
    %16 = sbr.rel (0) target = $region13
  $region12: #{_lambda_.4} parent=0 // pred_region
    _
  $region13: #{_lambda_.4} parent=0 // pred_fallthru
    _
  %v17 = vld [vmem:[%s1] sm:$0xff]
  %v18 = vld [vmem:[%s1 + $0x8] sm:$0xff]
  %v19 = vld [vmem:[%s1 + $0x10] sm:$0xff]
  %v20 = vld [vmem:[%s1 + $0x18] sm:$0xff]
  %v21 = vld [vmem:[%s0] sm:$0xff]
  %v22 = vld [vmem:[%s0 + $0x8] sm:$0xff]
  %v23 = vld [vmem:[%s0 + $0x10] sm:$0xff]
  %v24 = vld [vmem:[%s0 + $0x18] sm:$0xff]
  %v25 = vld [vmem:[%s0 + $0x20] sm:$0xff]
  %v26 = vld [vmem:[%s0 + $0x28] sm:$0xff]
  %v27 = vld [vmem:[%s2] sm:$0xff]
  %v28 = vld [vmem:[%s2 + $0x8] sm:$0xff]
  %v29 = vld [vmem:[%s2 + $0x10] sm:$0xff]
  %v30 = vld [vmem:[%s2 + $0x18] sm:$0xff]
  %32 = vset.pattern.permute.xlu0 0
  %33 = vperm.xlu0 %32, %v27
  %v34 = vpop.permute.xlu0 %33
  %37 = vset.pattern.permute.xlu0 0
  %38 = vperm.xlu0 %37, %v28
  %v39 = vpop.permute.xlu0 %38
  %42 = vset.pattern.permute.xlu0 0
  %43 = vperm.xlu0 %42, %v29
  %v44 = vpop.permute.xlu0 %43
  %47 = vset.pattern.permute.xlu0 0
  %48 = vperm.xlu0 %47, %v30
  %v49 = vpop.permute.xlu0 %48
  %vm51 = vcmask 392192
  %v53 = vsel %vm51, %v17, 0
  %v56 = vsel %vm51, %v18, 0
  %v59 = vsel %vm51, %v19, 0
  %v62 = vsel %vm51, %v20, 0
  %64 = vmatprep.subr.mxu0 0.0
  %65 = vmatpush1.msra.mxu0 %v21
  %66 = vmatprep.subr.mxu0 0.0
  %67 = vmatpush1.msra.mxu0 %v22
  %68 = vmatprep.subr.mxu0 0.0
  %69 = vmatpush1.msra.mxu0 %v23
  %70 = vmatprep.subr.mxu0 0.0
  %71 = vmatpush1.msra.mxu0 %v24
  %72 = vmatprep.subr.mxu0 0.0
  %73 = vmatpush1.msra.mxu0 %v25
  %74 = vmatprep.subr.mxu0 0.0
  %75 = vmatpush1.msra.mxu0 %v26
  %76 = vmatprep.subr.mxu0 0.0
  %77 = vmatpush1.msra.mxu0 0.0
  %78 = vmatprep.subr.mxu0 0.0
  %79 = vmatpush1.msra.mxu0 0.0
  %80 = vmatprep.subr.mxu0 0.0
  %81 = vmatpush1.msra.mxu0 0.0
  %82 = vmatprep.subr.mxu0 0.0
  %83 = vmatpush1.msra.mxu0 0.0
  %84 = vmatprep.subr.mxu0 0.0
  %85 = vmatpush1.msra.mxu0 0.0
  %86 = vmatprep.subr.mxu0 0.0
  %87 = vmatpush1.msra.mxu0 0.0
  %88 = vmatprep.subr.mxu0 0.0
  %89 = vmatpush1.msra.mxu0 0.0
  %90 = vmatprep.subr.mxu0 0.0
  %91 = vmatpush1.msra.mxu0 0.0
  %92 = vmatprep.subr.mxu0 0.0
  %93 = vmatpush1.msra.mxu0 0.0
  %94 = vmatprep.subr.mxu0 0.0
  %95 = vmatpush1.msra.mxu0 0.0
  %96 = vmatprep.subr.mxu0 0.0
  %97 = vmatpush1.msra.mxu0 0.0
  %98 = vmatprep.subr.mxu0 0.0
  %99 = vmatpush1.msra.mxu0 0.0
  %100 = vmatprep.subr.mxu0 0.0
  %101 = vmatpush1.msra.mxu0 0.0
  %102 = vmatprep.subr.mxu0 0.0
  %103 = vmatpush1.msra.mxu0 0.0
  %104 = vmatprep.subr.mxu0 0.0
  %105 = vmatpush1.msra.mxu0 0.0
  %106 = vmatprep.subr.mxu0 0.0
  %107 = vmatpush1.msra.mxu0 0.0
  %108 = vmatprep.subr.mxu0 0.0
  %109 = vmatpush1.msra.mxu0 0.0
  %110 = vmatprep.subr.mxu0 0.0
  %111 = vmatpush1.msra.mxu0 0.0
  %112 = vmatprep.subr.mxu0 0.0
  %113 = vmatpush1.msra.mxu0 0.0
  %114 = vmatprep.subr.mxu0 0.0
  %115 = vmatpush1.msra.mxu0 0.0
  %116 = vmatprep.subr.mxu0 0.0
  %117 = vmatpush1.msra.mxu0 0.0
  %118 = vmatprep.subr.mxu0 0.0
  %119 = vmatpush1.msra.mxu0 0.0
  %120 = vmatprep.subr.mxu0 0.0
  %121 = vmatpush1.msra.mxu0 0.0
  %122 = vmatprep.subr.mxu0 0.0
  %123 = vmatpush1.msra.mxu0 0.0
  %124 = vmatprep.subr.mxu0 0.0
  %125 = vmatpush1.msra.mxu0 0.0
  %126 = vmatprep.subr.mxu0 0.0
  %127 = vmatpush1.msra.mxu0 0.0
  %128 = vmatprep.mubr.f32.mxu0 0.0
  %129 = vmatmul.mubr.f32.gmra.mrb[0].mxu0 %v53
  %v130 = vpop.f32.mrb[0].mxu0
  %v131 = vadd.f32 %v34, %v130
  %v132 = vpop.f32.mrb[0].mxu0
  %133 = vmatprep.mubr.f32.mxu0 0.0
  %134 = vmatmul.mubr.f32.gmra.mrb[0].mxu0 %v56
  %v135 = vpop.f32.mrb[0].mxu0
  %v136 = vadd.f32 %v39, %v135
  %v137 = vpop.f32.mrb[0].mxu0
  %138 = vmatprep.mubr.f32.mxu0 0.0
  %139 = vmatmul.mubr.f32.gmra.mrb[0].mxu0 %v59
  %v140 = vpop.f32.mrb[0].mxu0
  %v141 = vadd.f32 %v44, %v140
  %v142 = vpop.f32.mrb[0].mxu0
  %143 = vmatprep.mubr.f32.mxu0 0.0
  %144 = vmatmul.mubr.f32.gmra.mrb[0].mxu0 %v62
  %v145 = vpop.f32.mrb[0].mxu0
  %v146 = vadd.f32 %v49, %v145
  %v147 = vpop.f32.mrb[0].mxu0
  %148 = vdwg.mxu0
  %149 = vst [vmem:[%s3] sm:$0xff] %v131
  %150 = vst [vmem:[%s3 + $0x8] sm:$0xff] %v136
  %151 = vst [vmem:[%s3 + $0x10] sm:$0xff] %v141
  %152 = vst [vmem:[%s3 + $0x18] sm:$0xff] %v146
  %153 = vadd.xlane.f32.xlu0 %v131
  %v154 = vpop.xlane.xlu0 %153
  %155 = vadd.xlane.f32.xlu0 %v136
  %v156 = vpop.xlane.xlu0 %155
  %157 = vadd.xlane.f32.xlu0 %v141
  %v158 = vpop.xlane.xlu0 %157
  %159 = vadd.xlane.f32.xlu0 %v146
  %v160 = vpop.xlane.xlu0 %159
  %vm161 = vcmask 7168
  %162 = vst.msk [vmem:[%s4] sm:$0xff] %vm161, %v154
  %163 = vst.msk [vmem:[%s4 + $0x8] sm:$0xff] %vm161, %v156
  %164 = vst.msk [vmem:[%s4 + $0x10] sm:$0xff] %vm161, %v158
  %165 = vst.msk [vmem:[%s4 + $0x18] sm:$0xff] %vm161, %v160
  %v166 = vmul.f32 %v131, %v131
  %v167 = vmul.f32 %v136, %v136
  %v168 = vmul.f32 %v141, %v141
  %v169 = vmul.f32 %v146, %v146
  %170 = vadd.xlane.f32.xlu0 %v166
  %v171 = vpop.xlane.xlu0 %170
  %172 = vadd.xlane.f32.xlu0 %v167
  %v173 = vpop.xlane.xlu0 %172
  %174 = vadd.xlane.f32.xlu0 %v168
  %v175 = vpop.xlane.xlu0 %174
  %176 = vadd.xlane.f32.xlu0 %v169
  %v177 = vpop.xlane.xlu0 %176
  %178 = vst.msk [vmem:[%s5] sm:$0xff] %vm161, %v171
  %179 = vst.msk [vmem:[%s5 + $0x8] sm:$0xff] %vm161, %v173
  %180 = vst.msk [vmem:[%s5 + $0x10] sm:$0xff] %vm161, %v175
  %181 = vst.msk [vmem:[%s5 + $0x18] sm:$0xff] %vm161, %v177
  // Predicated region
  $region14: #{_lambda_.4} parent=0 // pred_check
    _
  $region15: #{_lambda_.4} parent=0 // pred_check_branch
    %183 = sbr.rel (0) target = $region17
  $region16: #{_lambda_.4} parent=0 // pred_region
    _
  $region17: #{_lambda_.4} parent=0 // pred_fallthru
    _
  // Predicated region
  $region18: #{_lambda_.4} parent=0 // pred_check
    _
  $region19: #{_lambda_.4} parent=0 // pred_check_branch
    %185 = sbr.rel (0) target = $region21
  $region20: #{_lambda_.4} parent=0 // pred_region
    _
  $region21: #{_lambda_.4} parent=0 // pred_fallthru
    _
  // Predicated region
  $region22: #{_lambda_.4} parent=0 // pred_check
    _
  $region23: #{_lambda_.4} parent=0 // pred_check_branch
    %187 = sbr.rel (0) target = $region25
  $region24: #{_lambda_.4} parent=0 // pred_region
    _
  $region25: #{_lambda_.4} parent=0 // pred_fallthru
    _
  // Predicated region
  $region26: #{_lambda_.4} parent=0 // pred_check
    _
  $region27: #{_lambda_.4} parent=0 // pred_check_branch
    %189 = sbr.rel (0) target = $region29
  $region28: #{_lambda_.4} parent=0 // pred_region
    _
  $region29: #{_lambda_.4} parent=0 // pred_fallthru
    _
  // Predicated region
  $region30: #{_lambda_.4} parent=0 // pred_check
    _
  $region31: #{_lambda_.4} parent=0 // pred_check_branch
    %191 = sbr.rel (0) target = $region33
  $region32: #{_lambda_.4} parent=0 // pred_region
    _
  $region33: #{_lambda_.4} parent=0 // pred_fallthru
    _
  // Predicated region
  $region34: #{_lambda_.4} parent=0 // pred_check
    _
  $region35: #{_lambda_.4} parent=0 // pred_check_branch
    %193 = sbr.rel (0) target = $region37
  $region36: #{_lambda_.4} parent=0 // pred_region
    _
  $region37: #{_lambda_.4} parent=0 // pred_fallthru
    _

// kernel: _lambda_.7
$region0: #{_lambda_.7}
  #allocation0 [shape = 'u32[]', space=smem, size = 0x4, offset = 0x4, fixed_abs, tag = 'smem constant byte address 0x4 - core index']
  #allocation1 [shape = 'u32[144,128]{1,0:T(1,128)}', space=vmem, size = 0x12000, scoped, tag = 'internal scratch']
  %s0 = inlined_call_operand.vmem [shape: f32[8,128], index: 0, kind: input, shape index: {}]
  %s1 = inlined_call_operand.vmem [shape: f32[8,1], index: 1, kind: input, shape index: {}]
  %s2 = inlined_call_operand.vmem [shape: f32[8,1], index: 2, kind: input, shape index: {}]
  %s3 = inlined_call_operand.vmem [shape: f32[8,128], index: 3, kind: output, shape index: {}]
  %s4 = sld [smem:[#allocation0]]
  $region22: #{_lambda_.7} parent=0
    _
  %s6 = ssub.s32 1, %s4
  %s7 = scalar_select 0, %s6, %s4
  // Predicated region
  $region2: #{_lambda_.7} parent=0 // pred_check
    _
  $region3: #{_lambda_.7} parent=0 // pred_check_branch
    %9 = sbr.rel (0) target = $region5
  $region4: #{_lambda_.7} parent=0 // pred_region
    _
  $region5: #{_lambda_.7} parent=0 // pred_fallthru
    _
  // Predicated region
  $region6: #{_lambda_.7} parent=0 // pred_check
    _
  $region7: #{_lambda_.7} parent=0 // pred_check_branch
    %11 = sbr.rel (0) target = $region9
  $region8: #{_lambda_.7} parent=0 // pred_region
    _
  $region9: #{_lambda_.7} parent=0 // pred_fallthru
    _
  // Predicated region
  $region10: #{_lambda_.7} parent=0 // pred_check
    _
  $region11: #{_lambda_.7} parent=0 // pred_check_branch
    %13 = sbr.rel (0) target = $region13
  $region12: #{_lambda_.7} parent=0 // pred_region
    _
  $region13: #{_lambda_.7} parent=0 // pred_fallthru
    _
  %v14 = vld [vmem:[%s0] sm:$0xff]
  %v15 = vld [vmem:[%s1] sm:$0xff]
  %17 = vset.pattern.permute.xlu0 0
  %18 = vperm.xlu0 %17, %v15
  %v19 = vpop.permute.xlu0 %18
  %v21 = vmul.f32 %v14, %v19
  %v22 = vld [vmem:[%s2] sm:$0xff]
  %24 = vset.pattern.permute.xlu0 0
  %25 = vperm.xlu0 %24, %v22
  %v26 = vpop.permute.xlu0 %25
  %v28 = vadd.f32 %v21, %v26
  %v29 = vmax.f32 %v28, 0.0
  %30 = vst [vmem:[%s3] sm:$0xff] %v29
  // Predicated region
  $region14: #{_lambda_.7} parent=0 // pred_check
    _
  $region15: #{_lambda_.7} parent=0 // pred_check_branch
    %32 = sbr.rel (0) target = $region17
  $region16: #{_lambda_.7} parent=0 // pred_region
    _
  $region17: #{_lambda_.7} parent=0 // pred_fallthru
    _
  // Predicated region
  $region18: #{_lambda_.7} parent=0 // pred_check
    _
  $region19: #{_lambda_.7} parent=0 // pred_check_branch
    %34 = sbr.rel (0) target = $region21
  $region20: #{_lambda_.7} parent=0 // pred_region
    _
  $region21: #{_lambda_.7} parent=0 // pred_fallthru
    _

// kernel: _lambda_.6
$region0: #{_lambda_.6}
  #allocation0 [shape = 'u32[]', space=smem, size = 0x4, offset = 0x4, fixed_abs, tag = 'smem constant byte address 0x4 - core index']
  #allocation1 [shape = 'u32[144,128]{1,0:T(1,128)}', space=vmem, size = 0x12000, scoped, tag = 'internal scratch']
  %s0 = inlined_call_operand.vmem [shape: f32[32,128], index: 0, kind: input, shape index: {}]
  %s1 = inlined_call_operand.vmem [shape: f32[8,32], index: 1, kind: input, shape index: {}]
  %s2 = inlined_call_operand.vmem [shape: f32[8,1], index: 2, kind: input, shape index: {}]
  %s3 = inlined_call_operand.vmem [shape: f32[8,128], index: 3, kind: output, shape index: {0}]
  %s4 = inlined_call_operand.vmem [shape: f32[8,1], index: 4, kind: output, shape index: {1}]
  %s5 = inlined_call_operand.vmem [shape: f32[8,1], index: 5, kind: output, shape index: {2}]
  %6 = xla_tuple %s3, %s4, %s5
  %s7 = sld [smem:[#allocation0]]
  $region38: #{_lambda_.6} parent=0
    _
  %s9 = ssub.s32 1, %s7
  %s10 = scalar_select 0, %s9, %s7
  // Predicated region
  $region2: #{_lambda_.6} parent=0 // pred_check
    _
  $region3: #{_lambda_.6} parent=0 // pred_check_branch
    %12 = sbr.rel (0) target = $region5
  $region4: #{_lambda_.6} parent=0 // pred_region
    _
  $region5: #{_lambda_.6} parent=0 // pred_fallthru
    _
  // Predicated region
  $region6: #{_lambda_.6} parent=0 // pred_check
    _
  $region7: #{_lambda_.6} parent=0 // pred_check_branch
    %14 = sbr.rel (0) target = $region9
  $region8: #{_lambda_.6} parent=0 // pred_region
    _
  $region9: #{_lambda_.6} parent=0 // pred_fallthru
    _
  // Predicated region
  $region10: #{_lambda_.6} parent=0 // pred_check
    _
  $region11: #{_lambda_.6} parent=0 // pred_check_branch
    %16 = sbr.rel (0) target = $region13
  $region12: #{_lambda_.6} parent=0 // pred_region
    _
  $region13: #{_lambda_.6} parent=0 // pred_fallthru
    _
  %v17 = vld [vmem:[%s1] sm:$0xff]
  %v18 = vld [vmem:[%s0] sm:$0xff]
  %v19 = vld [vmem:[%s0 + $0x8] sm:$0xff]
  %v20 = vld [vmem:[%s0 + $0x10] sm:$0xff]
  %v21 = vld [vmem:[%s0 + $0x18] sm:$0xff]
  %v22 = vld [vmem:[%s2] sm:$0xff]
  %24 = vset.pattern.permute.xlu0 0
  %25 = vperm.xlu0 %24, %v22
  %v26 = vpop.permute.xlu0 %25
  %vm28 = vcmask 261120
  %v30 = vsel %vm28, %v17, 0
  %32 = vmatprep.subr.mxu0 0.0
  %33 = vmatpush1.msra.mxu0 %v18
  %34 = vmatprep.subr.mxu0 0.0
  %35 = vmatpush1.msra.mxu0 %v19
  %36 = vmatprep.subr.mxu0 0.0
  %37 = vmatpush1.msra.mxu0 %v20
  %38 = vmatprep.subr.mxu0 0.0
  %39 = vmatpush1.msra.mxu0 %v21
  %40 = vmatprep.subr.mxu0 0.0
  %41 = vmatpush1.msra.mxu0 0.0
  %42 = vmatprep.subr.mxu0 0.0
  %43 = vmatpush1.msra.mxu0 0.0
  %44 = vmatprep.subr.mxu0 0.0
  %45 = vmatpush1.msra.mxu0 0.0
  %46 = vmatprep.subr.mxu0 0.0
  %47 = vmatpush1.msra.mxu0 0.0
  %48 = vmatprep.subr.mxu0 0.0
  %49 = vmatpush1.msra.mxu0 0.0
  %50 = vmatprep.subr.mxu0 0.0
  %51 = vmatpush1.msra.mxu0 0.0
  %52 = vmatprep.subr.mxu0 0.0
  %53 = vmatpush1.msra.mxu0 0.0
  %54 = vmatprep.subr.mxu0 0.0
  %55 = vmatpush1.msra.mxu0 0.0
  %56 = vmatprep.subr.mxu0 0.0
  %57 = vmatpush1.msra.mxu0 0.0
  %58 = vmatprep.subr.mxu0 0.0
  %59 = vmatpush1.msra.mxu0 0.0
  %60 = vmatprep.subr.mxu0 0.0
  %61 = vmatpush1.msra.mxu0 0.0
  %62 = vmatprep.subr.mxu0 0.0
  %63 = vmatpush1.msra.mxu0 0.0
  %64 = vmatprep.subr.mxu0 0.0
  %65 = vmatpush1.msra.mxu0 0.0
  %66 = vmatprep.subr.mxu0 0.0
  %67 = vmatpush1.msra.mxu0 0.0
  %68 = vmatprep.subr.mxu0 0.0
  %69 = vmatpush1.msra.mxu0 0.0
  %70 = vmatprep.subr.mxu0 0.0
  %71 = vmatpush1.msra.mxu0 0.0
  %72 = vmatprep.subr.mxu0 0.0
  %73 = vmatpush1.msra.mxu0 0.0
  %74 = vmatprep.subr.mxu0 0.0
  %75 = vmatpush1.msra.mxu0 0.0
  %76 = vmatprep.subr.mxu0 0.0
  %77 = vmatpush1.msra.mxu0 0.0
  %78 = vmatprep.subr.mxu0 0.0
  %79 = vmatpush1.msra.mxu0 0.0
  %80 = vmatprep.subr.mxu0 0.0
  %81 = vmatpush1.msra.mxu0 0.0
  %82 = vmatprep.subr.mxu0 0.0
  %83 = vmatpush1.msra.mxu0 0.0
  %84 = vmatprep.subr.mxu0 0.0
  %85 = vmatpush1.msra.mxu0 0.0
  %86 = vmatprep.subr.mxu0 0.0
  %87 = vmatpush1.msra.mxu0 0.0
  %88 = vmatprep.subr.mxu0 0.0
  %89 = vmatpush1.msra.mxu0 0.0
  %90 = vmatprep.subr.mxu0 0.0
  %91 = vmatpush1.msra.mxu0 0.0
  %92 = vmatprep.subr.mxu0 0.0
  %93 = vmatpush1.msra.mxu0 0.0
  %94 = vmatprep.subr.mxu0 0.0
  %95 = vmatpush1.msra.mxu0 0.0
  %96 = vmatprep.mubr.f32.mxu0 0.0
  %97 = vmatmul.mubr.f32.gmra.mrb[0].mxu0 %v30
  %v98 = vpop.f32.mrb[0].mxu0
  %v99 = vadd.f32 %v26, %v98
  %v100 = vpop.f32.mrb[0].mxu0
  %101 = vdwg.mxu0
  %102 = vst [vmem:[%s3] sm:$0xff] %v99
  %103 = vadd.xlane.f32.xlu0 %v99
  %v104 = vpop.xlane.xlu0 %103
  %vm105 = vcmask 7168
  %106 = vst.msk [vmem:[%s4] sm:$0xff] %vm105, %v104
  %v107 = vmul.f32 %v99, %v99
  %108 = vadd.xlane.f32.xlu0 %v107
  %v109 = vpop.xlane.xlu0 %108
  %110 = vst.msk [vmem:[%s5] sm:$0xff] %vm105, %v109
  // Predicated region
  $region14: #{_lambda_.6} parent=0 // pred_check
    _
  $region15: #{_lambda_.6} parent=0 // pred_check_branch
    %112 = sbr.rel (0) target = $region17
  $region16: #{_lambda_.6} parent=0 // pred_region
    _
  $region17: #{_lambda_.6} parent=0 // pred_fallthru
    _
  // Predicated region
  $region18: #{_lambda_.6} parent=0 // pred_check
    _
  $region19: #{_lambda_.6} parent=0 // pred_check_branch
    %114 = sbr.rel (0) target = $region21
  $region20: #{_lambda_.6} parent=0 // pred_region
    _
  $region21: #{_lambda_.6} parent=0 // pred_fallthru
    _
  // Predicated region
  $region22: #{_lambda_.6} parent=0 // pred_check
    _
  $region23: #{_lambda_.6} parent=0 // pred_check_branch
    %116 = sbr.rel (0) target = $region25
  $region24: #{_lambda_.6} parent=0 // pred_region
    _
  $region25: #{_lambda_.6} parent=0 // pred_fallthru
    _
  // Predicated region
  $region26: #{_lambda_.6} parent=0 // pred_check
    _
  $region27: #{_lambda_.6} parent=0 // pred_check_branch
    %118 = sbr.rel (0) target = $region29
  $region28: #{_lambda_.6} parent=0 // pred_region
    _
  $region29: #{_lambda_.6} parent=0 // pred_fallthru
    _
  // Predicated region
  $region30: #{_lambda_.6} parent=0 // pred_check
    _
  $region31: #{_lambda_.6} parent=0 // pred_check_branch
    %120 = sbr.rel (0) target = $region33
  $region32: #{_lambda_.6} parent=0 // pred_region
    _
  $region33: #{_lambda_.6} parent=0 // pred_fallthru
    _
  // Predicated region
  $region34: #{_lambda_.6} parent=0 // pred_check
    _
  $region35: #{_lambda_.6} parent=0 // pred_check_branch
    %122 = sbr.rel (0) target = $region37
  $region36: #{_lambda_.6} parent=0 // pred_region
    _
  $region37: #{_lambda_.6} parent=0 // pred_fallthru
    _

</llo_original>
